<compile_context>
chip_gen: v5e
topology: v5e:2x2
jax: 0.10.0
libtpu: 0.0.40
codegen_flags: <defaults>
</compile_context>

<pallas_src>
import functools

import jax
import jax.numpy as jnp
from jax.experimental import pallas as pl
from jax.experimental.pallas import tpu as pltpu

_NEG_BIG = -9e15


def _elu(x):
    return jnp.where(x > 0, x, jnp.exp(x) - 1.0)


def _tpu_generation():
    try:
        kind = jax.devices()[0].device_kind.lower()
    except Exception:
        return 0
    for g in (7, 6, 5, 4, 3, 2):
        if ("v%d" % g) in kind or ("tpu%d" % g) in kind:
            return g
    return 0


def _pick_row_tile(n, *, cap, cdt, vmem_limit):
    if n <= 64:
        return n  # full-extent block; too small to split given int8's 32-row granularity
    # >= 2 grid steps so "parallel" can shard across v7x's two TensorCores.
    half = -(-n // 2)
    tm = min(cap, ((half + 31) // 32) * 32)
    # Shrink for large N so ~4 live (tm, N) cdt arrays + the int8 adjacency tile fit
    # comfortably inside a third of the VMEM budget.
    row_bytes = n * (4 * jnp.dtype(cdt).itemsize + 1)
    max_rows = max(32, (vmem_limit // 3 // max(row_bytes, 1)) // 32 * 32)
    # TODO(synk): for very large graphs add a column (neighbor) grid axis with
    # flash-style online-softmax accumulation instead of only shrinking tm.
    return max(32, min(tm, max_rows))


def _block_diag(blocks):
    rows = sum(b.shape[0] for b in blocks)
    cols = sum(b.shape[1] for b in blocks)
    out = jnp.zeros((rows, cols), blocks[0].dtype)
    r = c = 0
    for b in blocks:
        out = out.at[r:r + b.shape[0], c:c + b.shape[1]].set(b)
        r += b.shape[0]
        c += b.shape[1]
    return out


# ---------------------------------------------------------------------------
# Kernel A: fused projection for all heads of layer 1.
#   whc = x @ [W_all | W_all @ A_all]   (single bf16 MXU matmul, f32 accumulation)
# ---------------------------------------------------------------------------
def gat_project_kernel(x_ref, wc_ref, wh_ref, f12_ref, *, fout):
    x = x_ref[...].astype(jnp.bfloat16)
    whc = jnp.dot(x, wc_ref[...], preferred_element_type=jnp.float32)   # (tm, fout + 2H)
    wh_ref[...] = whc[:, :fout].astype(wh_ref.dtype)
    f12_ref[...] = whc[:, fout:]


def gat_project(x, wc, *, fout, tm, vmem_limit):
    n, fin = x.shape
    wtot = wc.shape[1]
    two_h = wtot - fout
    return pl.pallas_call(
        functools.partial(gat_project_kernel, fout=fout),
        out_shape=(
            jax.ShapeDtypeStruct((n, fout), jnp.bfloat16),
            jax.ShapeDtypeStruct((n, two_h), jnp.float32),
        ),
        grid=(pl.cdiv(n, tm),),
        in_specs=[
            pl.BlockSpec((tm, fin), lambda i: (i, 0)),
            pl.BlockSpec((fin, wtot), lambda i: (0, 0)),   # combined weights, resident, bf16
        ],
        out_specs=(
            pl.BlockSpec((tm, fout), lambda i: (i, 0)),
            pl.BlockSpec((tm, two_h), lambda i: (i, 0)),
        ),
        compiler_params=pltpu.CompilerParams(
            dimension_semantics=("parallel",),
            vmem_limit_bytes=vmem_limit,
        ),
    )(x, wc)


# ---------------------------------------------------------------------------
# Shared per-head attention: softmax-weighted aggregation with the row-sum folded
# into the MXU matmul (whx_slice has a trailing ones column) and deferred
# normalization on the EUP.
# ---------------------------------------------------------------------------
def _attend(e, bias, alpha, whx_slice):
    e = jnp.maximum(e, alpha * e) + bias                    # LeakyReLU (alpha < 1) + mask bias
    m = jnp.max(e, axis=1, keepdims=True)
    p = jnp.exp(e - m)                                      # unnormalized softmax
    agg = jnp.dot(p.astype(jnp.bfloat16), whx_slice,
                  preferred_element_type=jnp.float32)       # (tm, fout_head + 1)
    f = agg.shape[1] - 1
    return agg[:, :f] * pl.reciprocal(agg[:, f:], approx=True)


# ---------------------------------------------------------------------------
# Kernel B ("hidden"): all heads of layer 1 + fused layer-2 projection.
# ---------------------------------------------------------------------------
def gat_attention_hidden_kernel(adj_ref, f1_ref, f2t_ref, whx_ref, w2_ref,
                                wh2_ref, f12_2_ref, h_scr, *,
                                nheads, fout_head, alpha, cdt):
    zero = jnp.array(0.0, cdt)
    neg = jnp.array(_NEG_BIG, cdt)
    bias = jnp.where(adj_ref[...] > 0, zero, neg)            # (tm, N), computed once
    f1 = f1_ref[...]                                          # (tm, H)  cdt
    f2t = f2t_ref[...]                                        # (H, N)   cdt
    fe = fout_head + 1

    for h in range(nheads):
        e = f1[:, h:h + 1] + f2t[h:h + 1, :]                  # (tm, N)
        out = _attend(e, bias, alpha, whx_ref[:, h * fe:(h + 1) * fe])
        # per-head store -> bounded live ranges, no concat copy
        h_scr[:, h * fout_head:(h + 1) * fout_head] = _elu(out).astype(h_scr.dtype)

    # Fused layer-2 projection: h is already in VMEM, Wo/a_out are tiny & resident.
    wh2c = jnp.dot(h_scr[...], w2_ref[...], preferred_element_type=jnp.float32)
    nclass = wh2_ref.shape[1]
    wh2_ref[...] = wh2c[:, :nclass].astype(wh2_ref.dtype)
    f12_2_ref[...] = wh2c[:, nclass:]


def gat_attention_hidden(adj_i8, f1, f2t, whx, w2c, *, nheads, fout_head, nclass,
                         alpha, cdt, tm, vmem_limit):
    n = adj_i8.shape[0]
    fe = fout_head + 1
    kern = functools.partial(gat_attention_hidden_kernel, nheads=nheads,
                             fout_head=fout_head, alpha=alpha, cdt=cdt)
    return pl.pallas_call(
        kern,
        out_shape=(
            jax.ShapeDtypeStruct((n, nclass), jnp.bfloat16),   # Wh of layer 2
            jax.ShapeDtypeStruct((n, 2), jnp.float32),         # [f1_2 | f2_2] of layer 2
        ),
        grid=(pl.cdiv(n, tm),),
        in_specs=[
            pl.BlockSpec((tm, n), lambda i: (i, 0)),                    # adjacency (int8)
            pl.BlockSpec((tm, nheads), lambda i: (i, 0)),               # f1 row tile
            pl.BlockSpec((nheads, n), lambda i: (0, 0)),                # f2^T, resident
            pl.BlockSpec((n, nheads * fe), lambda i: (0, 0)),           # [Wh_h | 1] per head, resident
            pl.BlockSpec((nheads * fout_head, nclass + 2), lambda i: (0, 0)),  # [Wo | Wo a_out]
        ],
        out_specs=(
            pl.BlockSpec((tm, nclass), lambda i: (i, 0)),
            pl.BlockSpec((tm, 2), lambda i: (i, 0)),
        ),
        scratch_shapes=[pltpu.VMEM((tm, nheads * fout_head), jnp.bfloat16)],
        compiler_params=pltpu.CompilerParams(
            dimension_semantics=("parallel",),
            vmem_limit_bytes=vmem_limit,
        ),
    )(adj_i8, f1, f2t, whx, w2c)


# ---------------------------------------------------------------------------
# Kernel B ("output"): single-head attention + ELU + row log_softmax.
# ---------------------------------------------------------------------------
def gat_attention_output_kernel(adj_ref, f1_ref, f2t_ref, whx_ref, out_ref, *, alpha, cdt):
    zero = jnp.array(0.0, cdt)
    neg = jnp.array(_NEG_BIG, cdt)
    bias = jnp.where(adj_ref[...] > 0, zero, neg)             # (tm, N)
    e = f1_ref[...] + f2t_ref[...]                            # (tm, 1) + (1, N)
    h = _attend(e, bias, alpha, whx_ref[...])                 # (tm, nclass) f32
    h = _elu(h)
    mm = jnp.max(h, axis=1, keepdims=True)
    sh = h - mm
    out_ref[...] = sh - jnp.log(jnp.sum(jnp.exp(sh), axis=1, keepdims=True))


def gat_attention_output(adj_i8, f1, f2t, whx, *, nclass, alpha, cdt, tm, vmem_limit):
    n = adj_i8.shape[0]
    kern = functools.partial(gat_attention_output_kernel, alpha=alpha, cdt=cdt)
    return pl.pallas_call(
        kern,
        out_shape=jax.ShapeDtypeStruct((n, nclass), jnp.float32),
        grid=(pl.cdiv(n, tm),),
        in_specs=[
            pl.BlockSpec((tm, n), lambda i: (i, 0)),
            pl.BlockSpec((tm, 1), lambda i: (i, 0)),
            pl.BlockSpec((1, n), lambda i: (0, 0)),
            pl.BlockSpec((n, nclass + 1), lambda i: (0, 0)),   # [Wh2 | 1], resident
        ],
        out_specs=pl.BlockSpec((tm, nclass), lambda i: (i, 0)),
        compiler_params=pltpu.CompilerParams(
            dimension_semantics=("parallel",),
            vmem_limit_bytes=vmem_limit,
        ),
    )(adj_i8, f1, f2t, whx)


# ---------------------------------------------------------------------------
# Parameters & full forward pass.
# ---------------------------------------------------------------------------
def init_gat_params(key, nfeat, nhid, nclass, nheads):
    """Xavier-uniform (gain=1.414) init, matching the reference GAT layers."""
    def xavier(key, shape, gain=1.414):
        fan_in, fan_out = shape
        bound = gain * jnp.sqrt(6.0 / (fan_in + fan_out))
        return jax.random.uniform(key, shape, jnp.float32, -bound, bound)

    keys = jax.random.split(key, 2 * nheads + 2)
    ws, a1s, a2s = [], [], []
    for h in range(nheads):
        w = xavier(keys[2 * h], (nfeat, nhid))
        a = xavier(keys[2 * h + 1], (2 * nhid, 1))
        ws.append(w)
        a1s.append(a[:nhid, :])
        a2s.append(a[nhid:, :])
    wo = xavier(keys[-2], (nhid * nheads, nclass))
    ao = xavier(keys[-1], (2 * nclass, 1))
    return {"Ws": ws, "a1s": a1s, "a2s": a2s,
            "Wo": wo, "a1o": ao[:nclass, :], "a2o": ao[nclass:, :]}


def gat_forward(x, adj, params, *, alpha):
    assert alpha < 1.0  # maximum-form LeakyReLU requires alpha < 1
    nheads = len(params["Ws"])
    nhid = params["Ws"][0].shape[1]
    nclass = params["Wo"].shape[1]
    n = x.shape[0]

    gen = _tpu_generation()
    # bf16 elementwise/exp chain only where the VPU/EUP are bf16-native (v6e/v7x).
    cdt = jnp.bfloat16 if gen >= 6 else jnp.float32
    vmem_limit = (100 * 1024 * 1024) if gen in (5, 6) else (48 * 1024 * 1024)
    cap = 512 if gen in (5, 6) else 256
    tm = _pick_row_tile(n, cap=cap, cdt=cdt, vmem_limit=vmem_limit)

    # adjacency is only a ">0" predicate: ship it as int8 (4x smaller HBM stream).
    adj_i8 = (adj > 0).astype(jnp.int8)

    # Layer-1 combined weights: [W_all | W_all @ A_all] (attention projection folded
    # into the main matmul), cast to bf16 ONCE here (no per-step recast in-kernel).
    w_all = jnp.concatenate(params["Ws"], axis=1)                       # (Fin, H*nhid)
    a_all = jnp.concatenate([_block_diag(params["a1s"]),
                             _block_diag(params["a2s"])], axis=1)       # (H*nhid, 2H)
    wc1 = jnp.concatenate([w_all, w_all @ a_all], axis=1).astype(jnp.bfloat16)

    # Layer-2 combined weights (consumed by the fused tail of the hidden kernel).
    a_out = jnp.concatenate([params["a1o"], params["a2o"]], axis=1)     # (nclass, 2)
    w2c = jnp.concatenate([params["Wo"], params["Wo"] @ a_out],
                          axis=1).astype(jnp.bfloat16)                  # (H*nhid, nclass+2)

    # dropout(x) -> identity (eval mode)
    wh1, f12_1 = gat_project(x, wc1, fout=nheads * nhid, tm=tm, vmem_limit=vmem_limit)
    f1_1 = f12_1[:, :nheads].astype(cdt)                                # (N, H)
    f2t_1 = jnp.transpose(f12_1[:, nheads:]).astype(cdt)                # (H, N), hoisted transpose
    ones = jnp.ones((n, nheads, 1), jnp.bfloat16)
    whx1 = jnp.concatenate([wh1.reshape(n, nheads, nhid), ones],
                           axis=2).reshape(n, nheads * (nhid + 1))      # [Wh_h | 1] per head

    # dropout(h) -> identity (eval mode)
    wh2, f12_2 = gat_attention_hidden(adj_i8, f1_1, f2t_1, whx1, w2c,
                                      nheads=nheads, fout_head=nhid, nclass=nclass,
                                      alpha=alpha, cdt=cdt, tm=tm, vmem_limit=vmem_limit)

    f1_2 = f12_2[:, :1].astype(cdt)                                     # (N, 1)
    f2t_2 = jnp.transpose(f12_2[:, 1:]).astype(cdt)                     # (1, N)
    whx2 = jnp.concatenate([wh2, jnp.ones((n, 1), jnp.bfloat16)], axis=1)  # (N, nclass+1)

    return gat_attention_output(adj_i8, f1_2, f2t_2, whx2, nclass=nclass,
                                alpha=alpha, cdt=cdt, tm=tm, vmem_limit=vmem_limit)


def gat_reference(x, adj, params, *, alpha):
    """Pure-JAX f32 reference of the PyTorch GAT forward (eval mode)."""
    def layer(xin, w, a1, a2, concat):
        wh = xin @ w
        e = wh @ a1 + (wh @ a2).T
        e = jnp.where(e > 0, e, alpha * e)
        e = jnp.where(adj > 0, e, _NEG_BIG)
        att = jax.nn.softmax(e, axis=1)
        h = att @ wh
        return jax.nn.elu(h) if concat else h

    heads = [layer(x, w, a1, a2, True)
             for w, a1, a2 in zip(params["Ws"], params["a1s"], params["a2s"])]
    h = jnp.concatenate(heads, axis=1)
    out = jax.nn.elu(layer(h, params["Wo"], params["a1o"], params["a2o"], False))
    return jax.nn.log_softmax(out, axis=1)


if __name__ == "__main__":
    N, nfeat, nhid, nclass, nheads = 16, 16, 8, 4, 4
    alpha = 0.2

    key = jax.random.PRNGKey(0)
    kx, kadj, kparams = jax.random.split(key, 3)

    x = jax.random.normal(kx, (N, nfeat), jnp.float32)
    # random symmetric-ish 0/1 adjacency with self loops
    adj = (jax.random.uniform(kadj, (N, N)) > 0.7).astype(jnp.float32)
    adj = jnp.clip(adj + adj.T + jnp.eye(N, dtype=jnp.float32), 0.0, 1.0)

    params = init_gat_params(kparams, nfeat, nhid, nclass, nheads)

    out = gat_forward(x, adj, params, alpha=alpha)      # (N, nclass) log-probs
    jax.block_until_ready(out)

    assert out.shape == (N, nclass)
    # rows of log_softmax must sum (in prob space) to ~1
    assert bool(jnp.allclose(jnp.sum(jnp.exp(out), axis=1), 1.0, atol=1e-4))
    # loose structural check vs. a pure-JAX f32 reference (kernel uses bf16 MXU inputs,
    # a bf16 elementwise chain on v6e/v7x, and an approximate reciprocal, so only gross
    # mismatches are flagged)
    ref = gat_reference(x, adj, params, alpha=alpha)
    assert float(jnp.max(jnp.abs(out - ref))) < 0.5
    print("KERNEL_OK")
</pallas_src>

<mosaic_0001>
module attributes {stable_mosaic.version = 11 : i64} {
  func.func @gat_project_kernel(%arg0: i32, %arg1: memref<16x16xf32, #tpu.memory_space<vmem>>, %arg2: memref<16x40xbf16, #tpu.memory_space<vmem>>, %arg3: memref<16x32xbf16, #tpu.memory_space<vmem>>, %arg4: memref<16x8xf32, #tpu.memory_space<vmem>>) attributes {dimension_semantics = [#tpu.dimension_semantics<parallel>], iteration_bounds = array<i64: 1>, scalar_prefetch = 0 : i64, scratch_operands = 0 : i64, tpu.core_type = #tpu.core_type<tc>, window_params = [{transform_indices = @transform_0, window_bounds = array<i64: 16, 16>}, {pipeline_mode = #tpu.pipeline_mode<synchronous>, transform_indices = @transform_1, window_bounds = array<i64: 16, 40>}, {transform_indices = @transform_2, window_bounds = array<i64: 16, 32>}, {transform_indices = @transform_3, window_bounds = array<i64: 16, 8>}]} {
    %c0 = arith.constant 0 : index
    %c0_0 = arith.constant 0 : index
    %0 = vector.load %arg1[%c0, %c0_0] : memref<16x16xf32, #tpu.memory_space<vmem>>, vector<16x16xf32>
    %1 = arith.truncf %0 : vector<16x16xf32> to vector<16x16xbf16>
    %c0_1 = arith.constant 0 : index
    %c0_2 = arith.constant 0 : index
    %2 = vector.load %arg2[%c0_1, %c0_2] : memref<16x40xbf16, #tpu.memory_space<vmem>>, vector<16x40xbf16>
    %cst = arith.constant dense<0.000000e+00> : vector<16x40xf32>
    %3 = tpu.matmul %1, %2, %cst {dimension_numbers = #tpu.dot_dimension_numbers<[1], [0], [0], [1], [0, 0, 1, 1], [], []>} : vector<16x16xbf16>, vector<16x40xbf16>, vector<16x40xf32> -> vector<16x40xf32>
    %4 = vector.extract_strided_slice %3 {offsets = [0, 0], sizes = [16, 32], strides = [1, 1]} : vector<16x40xf32> to vector<16x32xf32>
    %5 = arith.truncf %4 : vector<16x32xf32> to vector<16x32xbf16>
    %c0_3 = arith.constant 0 : index
    %c0_4 = arith.constant 0 : index
    %6 = vector.load %arg3[%c0_3, %c0_4] : memref<16x32xbf16, #tpu.memory_space<vmem>>, vector<16x32xbf16>
    tpu.vector_store %arg3[%c0_3, %c0_4], %5 {strides = array<i32>} : memref<16x32xbf16, #tpu.memory_space<vmem>>, vector<16x32xbf16>,
    %7 = vector.extract_strided_slice %3 {offsets = [0, 32], sizes = [16, 8], strides = [1, 1]} : vector<16x40xf32> to vector<16x8xf32>
    %c0_5 = arith.constant 0 : index
    %c0_6 = arith.constant 0 : index
    %8 = vector.load %arg4[%c0_5, %c0_6] : memref<16x8xf32, #tpu.memory_space<vmem>>, vector<16x8xf32>
    tpu.vector_store %arg4[%c0_5, %c0_6], %7 {strides = array<i32>} : memref<16x8xf32, #tpu.memory_space<vmem>>, vector<16x8xf32>,
    return
  }
  func.func @transform_0(%arg0: i32) -> (i32, i32) {
    %c0_i32 = arith.constant 0 : i32
    %c0_i32_0 = arith.constant 0 : i32
    return %arg0, %c0_i32 : i32, i32
  }
  func.func @transform_1(%arg0: i32) -> (i32, i32) {
    %c0_i32 = arith.constant 0 : i32
    %c0_i32_0 = arith.constant 0 : i32
    %c0_i32_1 = arith.constant 0 : i32
    return %c0_i32, %c0_i32_0 : i32, i32
  }
  func.func @transform_2(%arg0: i32) -> (i32, i32) {
    %c0_i32 = arith.constant 0 : i32
    %c0_i32_0 = arith.constant 0 : i32
    return %arg0, %c0_i32 : i32, i32
  }
  func.func @transform_3(%arg0: i32) -> (i32, i32) {
    %c0_i32 = arith.constant 0 : i32
    %c0_i32_0 = arith.constant 0 : i32
    return %arg0, %c0_i32 : i32, i32
  }
}

</mosaic_0001>

<llo_original>
// kernel: tpu_custom_call.1
$region0: #{tpu_custom_call.1}
  #allocation0 [shape = 'u32[]', space=smem, size = 0x4, offset = 0x4, fixed_abs, tag = 'smem constant byte address 0x4 - core index']
  #allocation1 [shape = 'u32[72,128]{1,0:T(1,128)}', space=vmem, size = 0x9000, scoped, tag = 'internal scratch']
  %s0 = inlined_call_operand.hbm [shape: f32[16,16], index: 0, kind: input, shape index: {}]
  %s1 = inlined_call_operand.hbm [shape: bf16[16,40], index: 1, kind: input, shape index: {}]
  %s2 = inlined_call_operand.hbm [shape: bf16[16,32], index: 2, kind: output, shape index: {0}]
  %s3 = inlined_call_operand.vmem [shape: f32[16,8], index: 3, kind: output, shape index: {1}]
  %4 = xla_tuple %s2, %s3
  %s5 = sld [smem:[#allocation0]]
  $region34: #{tpu_custom_call.1} parent=0
    _
  %s7 = ssub.s32 1, %s5
  %s8 = scalar_select 0, %s7, %s5
  $region1: #{tpu_custom_call.1} parent=0
    #allocation2 [shape = 'u8[8192]{0}', space=vmem, size = 0x2000, scoped, tag = 'input window, operand 0, single buffered']
    #allocation3 [shape = 's32[1]{0}', space=sflag, size = 0x4, scoped, tag = 'scoped memory for tpu_custom_call.1']
    #allocation4 [shape = 's32[1]{0}', space=sflag, size = 0x4, scoped, tag = 'scoped memory for tpu_custom_call.1']
    #allocation5 [shape = 'u8[4096]{0}', space=vmem, size = 0x1000, scoped, tag = 'input window, operand 1, single buffered']
    #allocation6 [shape = 's32[1]{0}', space=sflag, size = 0x4, scoped, tag = 'scoped memory for tpu_custom_call.1']
    #allocation7 [shape = 'u8[4096]{0}', space=vmem, size = 0x1000, scoped, tag = 'output window, operand 0, single buffered']
    %9 = vsyncpa [#allocation3], 0
    %10 = vsyncpa [#allocation6], 0
    %11 = vsyncpa [#allocation4], 0
    // Predicated region
    $region2: #{tpu_custom_call.1} parent=1 // pred_check
      _
    $region3: #{tpu_custom_call.1} parent=1 // pred_check_branch
      %13 = sbr.rel (0) target = $region5
    $region4: #{tpu_custom_call.1} parent=1 // pred_region
      %15 = vsyncadd [#allocation3], 0
      %s16 = sshll.u32 %s0, 4
      %s17 = int_to_ptr.hbm [resolvable:$true] %s16
      %s18 = sshll.u32 [#allocation2], 4
      %s19 = int_to_ptr.vmem [resolvable:$true] %s18
      %24 = dma.hbm_to_vmem [thread:$0]  %s17, 256, %s19, [#allocation3], 128, 128, 8
    $region5: #{tpu_custom_call.1} parent=1 // pred_fallthru
      _
    // Predicated region
    $region6: #{tpu_custom_call.1} parent=1 // pred_check
      _
    $region7: #{tpu_custom_call.1} parent=1 // pred_check_branch
      %26 = sbr.rel (0) target = $region9
    $region8: #{tpu_custom_call.1} parent=1 // pred_region
      %28 = vsyncadd [#allocation6], 0
      %s29 = sshll.u32 %s1, 4
      %s30 = int_to_ptr.hbm [resolvable:$true] %s29
      %s31 = sshll.u32 [#allocation5], 4
      %s32 = int_to_ptr.vmem [resolvable:$true] %s31
      %37 = dma.hbm_to_vmem [thread:$0]  %s30, 128, %s32, [#allocation6], 64, 64, 4
    $region9: #{tpu_custom_call.1} parent=1 // pred_fallthru
      _
    // Predicated region
    $region10: #{tpu_custom_call.1} parent=1 // pred_check
      _
    $region11: #{tpu_custom_call.1} parent=1 // pred_check_branch
      %39 = sbr.rel (0) target = $region13
    $region12: #{tpu_custom_call.1} parent=1 // pred_region
      %41 = dma.done [#allocation3], 256
    $region13: #{tpu_custom_call.1} parent=1 // pred_fallthru
      _
    // Predicated region
    $region14: #{tpu_custom_call.1} parent=1 // pred_check
      _
    $region15: #{tpu_custom_call.1} parent=1 // pred_check_branch
      %43 = sbr.rel (0) target = $region17
    $region16: #{tpu_custom_call.1} parent=1 // pred_region
      %45 = dma.done [#allocation6], 128
    $region17: #{tpu_custom_call.1} parent=1 // pred_fallthru
      _
    %v47 = vld [vmem:[#allocation2] sm:$0xff]
    %v48 = vld [vmem:[#allocation2 + $0x8] sm:$0xff]
    %v49 = vpack.c.bf16 %v48, %v47
    %v50 = vld [vmem:[#allocation5] sm:$0xf]
    %v51 = vld [vmem:[#allocation5 + $0x4] sm:$0xf]
    %v54 = vunpack.c.l.b16 %v50
    %v55 = vunpack.c.l.b16 %v51
    %v56 = vpack.c.b16 %v55, %v54
    %vm58 = vcmask 130048
    %v60 = vsel %vm58, %v49, 0
    %62 = vmatpush.bf16.msra.mxu0 0
    %63 = vmatpush.bf16.msra.mxu0 0
    %64 = vmatpush.bf16.msra.mxu0 0
    %65 = vmatpush.bf16.msra.mxu0 0
    %66 = vmatpush.bf16.msra.mxu0 0
    %67 = vmatpush.bf16.msra.mxu0 0
    %68 = vmatpush.bf16.msra.mxu0 0
    %69 = vmatpush.bf16.msra.mxu0 %v56
    %70 = vmatmul.bf16.gmra.mxu0 %v60
    %v71 = vpop.f32.mrf.mxu0
    %v72 = vadd.f32 0.0, %v71
    %v73 = vpop.f32.mrf.mxu0
    %v74 = vadd.f32 0.0, %v73
    %75 = vdwg.mxu0
    %v76 = vpack.c.bf16 %v72, %v72
    %v77 = vpack.c.bf16 %v74, %v74
    %vm78 = vcmask 257024
    %79 = vst.msk [vmem:[#allocation7] sm:$0xf] %vm78, %v76
    %80 = vst.msk [vmem:[#allocation7 + $0x4] sm:$0xf] %vm78, %v77
    %83 = vrot.lane.b32.xlu0 %v72, 96
    %v84 = vpop.permute.xlu0 %83
    %85 = vrot.lane.b32.xlu0 %v74, 96
    %v86 = vpop.permute.xlu0 %85
    %vm89 = vcmask 64512
    %90 = vst.msk [vmem:[%s3] sm:$0xff] %vm89, %v84
    %91 = vst.msk [vmem:[%s3 + $0x8] sm:$0xff] %vm89, %v86
    // Predicated region
    $region18: #{tpu_custom_call.1} parent=1 // pred_check
      _
    $region19: #{tpu_custom_call.1} parent=1 // pred_check_branch
      %93 = sbr.rel (0) target = $region21
    $region20: #{tpu_custom_call.1} parent=1 // pred_region
      %95 = vsyncadd [#allocation4], 0
      %s96 = sshll.u32 [#allocation7], 4
      %s97 = int_to_ptr.vmem [resolvable:$true] %s96
      %s98 = sshll.u32 %s2, 4
      %s99 = int_to_ptr.hbm [resolvable:$true] %s98
      %104 = dma.vmem_to_hbm [thread:$0]  %s97, 128, %s99, [#allocation4], 64, 64, 4
    $region21: #{tpu_custom_call.1} parent=1 // pred_fallthru
      _
    // Predicated region
    $region22: #{tpu_custom_call.1} parent=1 // pred_check
      _
    $region23: #{tpu_custom_call.1} parent=1 // pred_check_branch
      %106 = sbr.rel (0) target = $region25
    $region24: #{tpu_custom_call.1} parent=1 // pred_region
      _
    $region25: #{tpu_custom_call.1} parent=1 // pred_fallthru
      _
    // Predicated region
    $region26: #{tpu_custom_call.1} parent=1 // pred_check
      _
    $region27: #{tpu_custom_call.1} parent=1 // pred_check_branch
      %108 = sbr.rel (0) target = $region29
    $region28: #{tpu_custom_call.1} parent=1 // pred_region
      %110 = dma.done [#allocation4], 128
    $region29: #{tpu_custom_call.1} parent=1 // pred_fallthru
      _
    // Predicated region
    $region30: #{tpu_custom_call.1} parent=1 // pred_check
      _
    $region31: #{tpu_custom_call.1} parent=1 // pred_check_branch
      %112 = sbr.rel (0) target = $region33
    $region32: #{tpu_custom_call.1} parent=1 // pred_region
      _
    $region33: #{tpu_custom_call.1} parent=1 // pred_fallthru
      _
    %113 = vsyncpa [#allocation3], 1
    %114 = vsyncpa [#allocation6], 1
    %115 = vsyncpa [#allocation4], 1

</llo_original>
